<compile_context>
chip_gen: v6e
topology: v6e:2x2x1
jax: 0.10.0
libtpu: 0.0.40
codegen_flags: <defaults>
</compile_context>

<pallas_src>
import functools

import jax
import jax.numpy as jnp
from jax.experimental import pallas as pl
from jax.experimental.pallas import tpu as pltpu

_EPS = 1e-6  # nn.PairwiseDistance default eps (added elementwise to the diff)


def _pploss_kernel(rhs_ref, ia_ref, ib_ref, w_ref, out_ref, *,
                   bn, d, dist_bg_fake, dist_bg_real, dist_fake_real):
    """One grid step == one block of batch elements, folded into one matmul.

    rhs_ref : (bn, 2d+1) bf16   rows = patches of the batch block,
                                 cols = [x_hi | x_lo | gt**2]
    ia_ref  : (bp, 1)  int32    first pair index (already block-offset)
    ib_ref  : (bp, 1)  int32    second pair index (already block-offset)
    w_ref   : (bp, 1)  f32      pair weights (0 for padded pairs)
    out_ref : (8, 128) f32      per-block partial loss (broadcast over tile)
    """
    bp = ia_ref.shape[0]
    ia = ia_ref[...]                      # (bp, 1)
    ib = ib_ref[...]                      # (bp, 1)

    # Fused {-1, 0, +1} gather matrix (exact in bf16).
    col = jax.lax.broadcasted_iota(jnp.int32, (bp, bn), 1)
    s = ((col == ia).astype(jnp.float32)
         - (col == ib).astype(jnp.float32)).astype(jnp.bfloat16)   # (bp, bn)

    # Single bf16 MXU pass: gathers feature diffs (hi & lo) and the gt code.
    out = jnp.dot(s, rhs_ref[...], preferred_element_type=jnp.float32)  # (bp, 2d+1)

    diff = out[:, 0:d] + out[:, d:2 * d] + _EPS                   # (bp, d)
    pair_dist = jnp.sqrt(jnp.sum(diff * diff, axis=1, keepdims=True))  # (bp, 1)

    # |ga^2 - gb^2| is an exact small integer in f32.
    g = jnp.abs(out[:, 2 * d:2 * d + 1])                          # (bp, 1)
    gt_dist = ((g == 4.0).astype(jnp.float32) * dist_bg_fake      # {0,2} pair
               + (g == 1.0).astype(jnp.float32) * dist_bg_real    # {0,1} pair
               + (g == 3.0).astype(jnp.float32) * dist_fake_real) # {1,2} pair

    partial = jnp.sum(w_ref[...] * jnp.abs(gt_dist - pair_dist), keepdims=True)
    out_ref[...] = jnp.broadcast_to(partial, out_ref.shape)


def pploss_pallas(x, patch_pair, patch_gt, patch_pair_weight,
                  dist_bg_fake=15.0, dist_bg_real=2.0, dist_fake_real=17.0,
                  batch_block=None):
    """x: (B, N, D) float; patch_pair: (B, 2, P) int; patch_gt: (B, N) int;
    patch_pair_weight: (B, P) float. Returns scalar float32 loss."""
    b, n, d = x.shape
    p = patch_pair.shape[-1]

    # Pad patch / pair counts so the sublane dims of every block are tileable
    # (bf16 rows -> multiple of 16, int32/f32 rows -> multiple of 8).
    n_pad = max(16, pl.cdiv(n, 16) * 16)
    p_pad = max(8, pl.cdiv(p, 8) * 8)

    # Batch block: amortize per-grid-step overhead, keep the folded
    # (bb*p_pad, bb*n_pad) sign matrix comfortably small in VMEM.
    if batch_block is None:
        limit = (4 << 20) // (4 * p_pad * n_pad)
        batch_block = max(1, min(b, int(limit ** 0.5), 64))
    bb = batch_block
    nb = pl.cdiv(b, bb)
    b_pad = nb * bb

    # ---- augmented bf16 RHS: [x_hi | x_lo | gt**2] ----------------------
    x_f = x.astype(jnp.float32)
    x_hi = x_f.astype(jnp.bfloat16)
    x_lo = (x_f - x_hi.astype(jnp.float32)).astype(jnp.bfloat16)
    gt_code = (patch_gt.astype(jnp.float32) ** 2).astype(jnp.bfloat16)[..., None]
    rhs = jnp.concatenate([x_hi, x_lo, gt_code], axis=-1)          # (b, n, 2d+1)
    rhs = jnp.pad(rhs, ((0, b_pad - b), (0, n_pad - n), (0, 0)))
    rhs_flat = rhs.reshape(b_pad * n_pad, 2 * d + 1)

    # ---- pair indices, offset into the per-block flattened patch axis ----
    off = (jnp.arange(b_pad, dtype=jnp.int32) % bb) * n_pad        # (b_pad,)
    pp = patch_pair.astype(jnp.int32)
    ia = jnp.pad(pp[:, 0, :], ((0, b_pad - b), (0, p_pad - p)))
    ib = jnp.pad(pp[:, 1, :], ((0, b_pad - b), (0, p_pad - p)))
    ia = (ia + off[:, None]).reshape(b_pad * p_pad, 1)
    ib = (ib + off[:, None]).reshape(b_pad * p_pad, 1)

    w = jnp.pad(patch_pair_weight.astype(jnp.float32),
                ((0, b_pad - b), (0, p_pad - p))).reshape(b_pad * p_pad, 1)

    bn = bb * n_pad
    bp = bb * p_pad

    kernel = functools.partial(
        _pploss_kernel, bn=bn, d=d,
        dist_bg_fake=float(dist_bg_fake),
        dist_bg_real=float(dist_bg_real),
        dist_fake_real=float(dist_fake_real))

    partials = pl.pallas_call(
        kernel,
        out_shape=jax.ShapeDtypeStruct((nb, 8, 128), jnp.float32),
        grid=(nb,),
        in_specs=[
            pl.BlockSpec((bn, 2 * d + 1), lambda i: (i, 0)),   # augmented features
            pl.BlockSpec((bp, 1), lambda i: (i, 0)),           # idx a
            pl.BlockSpec((bp, 1), lambda i: (i, 0)),           # idx b
            pl.BlockSpec((bp, 1), lambda i: (i, 0)),           # pair weights
        ],
        out_specs=pl.BlockSpec((None, 8, 128), lambda i: (i, 0, 0)),
        compiler_params=pltpu.CompilerParams(
            dimension_semantics=("parallel",)),                # no carried state
    )(rhs_flat, ia, ib, w)

    # mean over pairs, mean over batch (padded pairs/batches have zero weight)
    return jnp.sum(partials[:, 0, 0]) / jnp.float32(p * b)


def pploss_ref(x, patch_pair, patch_gt, patch_pair_weight,
               dist_bg_fake=15.0, dist_bg_real=2.0, dist_fake_real=17.0):
    """Plain-JAX reference matching the PyTorch forward (float32)."""
    b = x.shape[0]
    loss = jnp.float32(0.0)
    for i in range(b):
        ia = patch_pair[i, 0]
        ib = patch_pair[i, 1]
        xa = x[i][ia].astype(jnp.float32)
        xb = x[i][ib].astype(jnp.float32)
        pair_dist = jnp.sqrt(jnp.sum((xa - xb + _EPS) ** 2, axis=-1))
        ga = patch_gt[i][ia].astype(jnp.float32)
        gb = patch_gt[i][ib].astype(jnp.float32)
        gt_dist = ((jnp.abs(ga - gb) == 2).astype(jnp.float32) * dist_bg_fake
                   + (jnp.abs(ga + gb) == 1).astype(jnp.float32) * dist_bg_real
                   + (jnp.abs(ga + gb) == 3).astype(jnp.float32) * dist_fake_real)
        loss = loss + jnp.mean(patch_pair_weight[i].astype(jnp.float32)
                               * jnp.abs(gt_dist - pair_dist))
    return loss / float(b)


def _run_case(key, B, N, D, P):
    k1, k2, k3, k4 = jax.random.split(key, 4)
    x = jax.random.normal(k1, (B, N, D), dtype=jnp.float32)
    patch_pair = jax.random.randint(k2, (B, 2, P), 0, N, dtype=jnp.int32)
    patch_gt = jax.random.randint(k3, (B, N), 0, 3, dtype=jnp.int32)  # 0=bg 1=real 2=fake
    patch_pair_weight = jax.random.uniform(k4, (B, P), dtype=jnp.float32)

    loss_kernel = jax.block_until_ready(
        pploss_pallas(x, patch_pair, patch_gt, patch_pair_weight))
    loss_ref = jax.block_until_ready(
        pploss_ref(x, patch_pair, patch_gt, patch_pair_weight))
    err = abs(float(loss_kernel) - float(loss_ref))
    tol = 5e-4 * (1.0 + abs(float(loss_ref)))
    assert err < tol, (B, N, D, P, float(loss_kernel), float(loss_ref))


if __name__ == "__main__":
    key = jax.random.PRNGKey(0)
    k_a, k_b = jax.random.split(key)
    # batch=2, patches=16, feature dim=32, pairs=8 (aligned shapes)
    _run_case(k_a, B=2, N=16, D=32, P=8)
    # odd shapes exercise the padding path
    _run_case(k_b, B=3, N=12, D=32, P=5)
    print("KERNEL_OK")
</pallas_src>

<mosaic_0001>
module attributes {stable_mosaic.version = 11 : i64} {
  func.func @_pploss_kernel(%arg0: i32, %arg1: memref<32x65xbf16, #tpu.memory_space<vmem>>, %arg2: memref<16x1xi32, #tpu.memory_space<vmem>>, %arg3: memref<16x1xi32, #tpu.memory_space<vmem>>, %arg4: memref<16x1xf32, #tpu.memory_space<vmem>>, %arg5: memref<1x8x128xf32, #tpu.memory_space<vmem>>) attributes {dimension_semantics = [#tpu.dimension_semantics<parallel>], iteration_bounds = array<i64: 1>, scalar_prefetch = 0 : i64, scratch_operands = 0 : i64, tpu.core_type = #tpu.core_type<tc>, window_params = [{transform_indices = @transform_0, window_bounds = array<i64: 32, 65>}, {transform_indices = @transform_1, window_bounds = array<i64: 16, 1>}, {transform_indices = @transform_2, window_bounds = array<i64: 16, 1>}, {transform_indices = @transform_3, window_bounds = array<i64: 16, 1>}, {transform_indices = @transform_4, window_bounds = array<i64: 1, 8, 128>}]} {
    %c0 = arith.constant 0 : index
    %c0_0 = arith.constant 0 : index
    %0 = vector.load %arg2[%c0, %c0_0] : memref<16x1xi32, #tpu.memory_space<vmem>>, vector<16x1xi32>
    %c0_1 = arith.constant 0 : index
    %c0_2 = arith.constant 0 : index
    %1 = vector.load %arg3[%c0_1, %c0_2] : memref<16x1xi32, #tpu.memory_space<vmem>>, vector<16x1xi32>
    %2 = tpu.iota {dimensions = array<i32: 1>} : vector<16x32xi32>
    %3 = vector.broadcast %0 : vector<16x1xi32> to vector<16x32xi32>
    %4 = arith.cmpi eq, %2, %3 : vector<16x32xi32>
    %5 = arith.extui %4 : vector<16x32xi1> to vector<16x32xi32>
    %6 = arith.sitofp %5 : vector<16x32xi32> to vector<16x32xf32>
    %7 = vector.broadcast %1 : vector<16x1xi32> to vector<16x32xi32>
    %8 = arith.cmpi eq, %2, %7 : vector<16x32xi32>
    %9 = arith.extui %8 : vector<16x32xi1> to vector<16x32xi32>
    %10 = arith.sitofp %9 : vector<16x32xi32> to vector<16x32xf32>
    %11 = arith.subf %6, %10 : vector<16x32xf32>
    %12 = arith.truncf %11 : vector<16x32xf32> to vector<16x32xbf16>
    %c0_3 = arith.constant 0 : index
    %c0_4 = arith.constant 0 : index
    %13 = vector.load %arg1[%c0_3, %c0_4] : memref<32x65xbf16, #tpu.memory_space<vmem>>, vector<32x65xbf16>
    %cst = arith.constant dense<0.000000e+00> : vector<16x65xf32>
    %14 = tpu.matmul %12, %13, %cst {dimension_numbers = #tpu.dot_dimension_numbers<[1], [0], [0], [1], [0, 0, 1, 1], [], []>} : vector<16x32xbf16>, vector<32x65xbf16>, vector<16x65xf32> -> vector<16x65xf32>
    %15 = vector.extract_strided_slice %14 {offsets = [0, 0], sizes = [16, 32], strides = [1, 1]} : vector<16x65xf32> to vector<16x32xf32>
    %16 = vector.extract_strided_slice %14 {offsets = [0, 32], sizes = [16, 32], strides = [1, 1]} : vector<16x65xf32> to vector<16x32xf32>
    %17 = arith.addf %15, %16 : vector<16x32xf32>
    %cst_5 = arith.constant 9.99999997E-7 : f32
    %18 = vector.broadcast %cst_5 : f32 to vector<16x32xf32>
    %19 = arith.addf %17, %18 : vector<16x32xf32>
    %20 = arith.mulf %19, %19 : vector<16x32xf32>
    %cst_6 = arith.constant dense<0.000000e+00> : vector<16xf32>
    %21 = vector.multi_reduction <add>, %20, %cst_6 [1] : vector<16x32xf32> to vector<16xf32>
    %22 = vector.shape_cast %21 : vector<16xf32> to vector<16x1xf32>
    %23 = math.sqrt %22 : vector<16x1xf32>
    %24 = vector.extract_strided_slice %14 {offsets = [0, 64], sizes = [16, 1], strides = [1, 1]} : vector<16x65xf32> to vector<16x1xf32>
    %25 = math.absf %24 : vector<16x1xf32>
    %cst_7 = arith.constant 4.000000e+00 : f32
    %26 = vector.broadcast %cst_7 : f32 to vector<16x1xf32>
    %27 = arith.cmpf oeq, %25, %26 : vector<16x1xf32>
    %28 = arith.extui %27 : vector<16x1xi1> to vector<16x1xi32>
    %29 = arith.sitofp %28 : vector<16x1xi32> to vector<16x1xf32>
    %cst_8 = arith.constant 1.500000e+01 : f32
    %30 = vector.broadcast %cst_8 : f32 to vector<16x1xf32>
    %31 = arith.mulf %29, %30 : vector<16x1xf32>
    %cst_9 = arith.constant 1.000000e+00 : f32
    %32 = vector.broadcast %cst_9 : f32 to vector<16x1xf32>
    %33 = arith.cmpf oeq, %25, %32 : vector<16x1xf32>
    %34 = arith.extui %33 : vector<16x1xi1> to vector<16x1xi32>
    %35 = arith.sitofp %34 : vector<16x1xi32> to vector<16x1xf32>
    %cst_10 = arith.constant 2.000000e+00 : f32
    %36 = vector.broadcast %cst_10 : f32 to vector<16x1xf32>
    %37 = arith.mulf %35, %36 : vector<16x1xf32>
    %38 = arith.addf %31, %37 : vector<16x1xf32>
    %cst_11 = arith.constant 3.000000e+00 : f32
    %39 = vector.broadcast %cst_11 : f32 to vector<16x1xf32>
    %40 = arith.cmpf oeq, %25, %39 : vector<16x1xf32>
    %41 = arith.extui %40 : vector<16x1xi1> to vector<16x1xi32>
    %42 = arith.sitofp %41 : vector<16x1xi32> to vector<16x1xf32>
    %cst_12 = arith.constant 1.700000e+01 : f32
    %43 = vector.broadcast %cst_12 : f32 to vector<16x1xf32>
    %44 = arith.mulf %42, %43 : vector<16x1xf32>
    %45 = arith.addf %38, %44 : vector<16x1xf32>
    %c0_13 = arith.constant 0 : index
    %c0_14 = arith.constant 0 : index
    %46 = vector.load %arg4[%c0_13, %c0_14] : memref<16x1xf32, #tpu.memory_space<vmem>>, vector<16x1xf32>
    %47 = arith.subf %45, %23 : vector<16x1xf32>
    %48 = math.absf %47 : vector<16x1xf32>
    %49 = arith.mulf %46, %48 : vector<16x1xf32>
    %50 = vector.shape_cast %49 : vector<16x1xf32> to vector<1x16x1xf32>
    %cst_15 = arith.constant dense<0.000000e+00> : vector<1xf32>
    %51 = vector.multi_reduction <add>, %50, %cst_15 [1, 2] : vector<1x16x1xf32> to vector<1xf32>
    %52 = vector.shape_cast %51 : vector<1xf32> to vector<1x1x1xf32>
    %53 = vector.extract %52[0, 0, 0] : f32 from vector<1x1x1xf32>
    %54 = vector.broadcast %53 : f32 to vector<1x1xf32>
    %55 = vector.shape_cast %54 : vector<1x1xf32> to vector<1x1xf32>
    %56 = vector.broadcast %55 : vector<1x1xf32> to vector<8x128xf32>
    %c0_16 = arith.constant 0 : index
    %c0_17 = arith.constant 0 : index
    %c0_18 = arith.constant 0 : index
    %57 = vector.load %arg5[%c0_16, %c0_17, %c0_18] : memref<1x8x128xf32, #tpu.memory_space<vmem>>, vector<1x8x128xf32>
    %58 = vector.shape_cast %57 : vector<1x8x128xf32> to vector<8x128xf32>
    %59 = vector.shape_cast %56 : vector<8x128xf32> to vector<1x8x128xf32>
    tpu.vector_store %arg5[%c0_16, %c0_17, %c0_18], %59 {strides = array<i32>} : memref<1x8x128xf32, #tpu.memory_space<vmem>>, vector<1x8x128xf32>,
    return
  }
  func.func @transform_0(%arg0: i32) -> (i32, i32) {
    %c0_i32 = arith.constant 0 : i32
    %c0_i32_0 = arith.constant 0 : i32
    return %arg0, %c0_i32 : i32, i32
  }
  func.func @transform_1(%arg0: i32) -> (i32, i32) {
    %c0_i32 = arith.constant 0 : i32
    %c0_i32_0 = arith.constant 0 : i32
    return %arg0, %c0_i32 : i32, i32
  }
  func.func @transform_2(%arg0: i32) -> (i32, i32) {
    %c0_i32 = arith.constant 0 : i32
    %c0_i32_0 = arith.constant 0 : i32
    return %arg0, %c0_i32 : i32, i32
  }
  func.func @transform_3(%arg0: i32) -> (i32, i32) {
    %c0_i32 = arith.constant 0 : i32
    %c0_i32_0 = arith.constant 0 : i32
    return %arg0, %c0_i32 : i32, i32
  }
  func.func @transform_4(%arg0: i32) -> (i32, i32, i32) {
    %c0_i32 = arith.constant 0 : i32
    %c0_i32_0 = arith.constant 0 : i32
    %c0_i32_1 = arith.constant 0 : i32
    return %arg0, %c0_i32, %c0_i32_0 : i32, i32, i32
  }
}

</mosaic_0001>

<llo_original>
// kernel: tpu_custom_call.1
$region0: #{tpu_custom_call.1}
  #allocation0 [shape = 'u32[]', space=smem, size = 0x4, offset = 0x4, fixed_abs, tag = 'smem constant byte address 0x4 - core index']
  #allocation1 [shape = 'u32[144,128]{1,0:T(1,128)}', space=vmem, size = 0x12000, scoped, tag = 'internal scratch']
  %s0 = inlined_call_operand.vmem [shape: bf16[32,65], index: 0, kind: input, shape index: {}]
  %s1 = inlined_call_operand.vmem [shape: s32[16,1], index: 1, kind: input, shape index: {}]
  %s2 = inlined_call_operand.vmem [shape: s32[16,1], index: 2, kind: input, shape index: {}]
  %s3 = inlined_call_operand.vmem [shape: f32[16,1], index: 3, kind: input, shape index: {}]
  %s4 = inlined_call_operand.hbm [shape: f32[1,8,128], index: 4, kind: output, shape index: {}]
  %s5 = sld [smem:[#allocation0]]
  $region26: #{tpu_custom_call.1} parent=0
    _
  %s7 = ssub.s32 1, %s5
  %s8 = scalar_select 0, %s7, %s5
  $region1: #{tpu_custom_call.1} parent=0
    #allocation2 [shape = 'u8[4096]{0}', space=vmem, size = 0x1000, scoped, tag = 'output window, operand 0, single buffered']
    #allocation3 [shape = 's32[1]{0}', space=sflag, size = 0x4, scoped, tag = 'scoped memory for tpu_custom_call.1']
    %9 = vsyncpa [#allocation3], 0
    // Predicated region
    $region2: #{tpu_custom_call.1} parent=1 // pred_check
      _
    $region3: #{tpu_custom_call.1} parent=1 // pred_check_branch
      %11 = sbr.rel (0) target = $region5
    $region4: #{tpu_custom_call.1} parent=1 // pred_region
      _
    $region5: #{tpu_custom_call.1} parent=1 // pred_fallthru
      _
    // Predicated region
    $region6: #{tpu_custom_call.1} parent=1 // pred_check
      _
    $region7: #{tpu_custom_call.1} parent=1 // pred_check_branch
      %13 = sbr.rel (0) target = $region9
    $region8: #{tpu_custom_call.1} parent=1 // pred_region
      _
    $region9: #{tpu_custom_call.1} parent=1 // pred_fallthru
      _
    // Predicated region
    $region10: #{tpu_custom_call.1} parent=1 // pred_check
      _
    $region11: #{tpu_custom_call.1} parent=1 // pred_check_branch
      %15 = sbr.rel (0) target = $region13
    $region12: #{tpu_custom_call.1} parent=1 // pred_region
      _
    $region13: #{tpu_custom_call.1} parent=1 // pred_fallthru
      _
    // Predicated region
    $region14: #{tpu_custom_call.1} parent=1 // pred_check
      _
    $region15: #{tpu_custom_call.1} parent=1 // pred_check_branch
      %17 = sbr.rel (0) target = $region17
    $region16: #{tpu_custom_call.1} parent=1 // pred_region
      _
    $region17: #{tpu_custom_call.1} parent=1 // pred_fallthru
      _
    %v19 = vld [vmem:[%s1] sm:$0xff]
    %v20 = vld [vmem:[%s1 + $0x8] sm:$0xff]
    %v21 = vld [vmem:[%s2] sm:$0xff]
    %v22 = vld [vmem:[%s2 + $0x8] sm:$0xff]
    %v23 = vlaneseq
    %v24 = vand.u32 %v23, 127
    %25 = vset.pattern.permute.xlu0 0
    %26 = vperm.xlu0 %25, %v19
    %v27 = vpop.permute.xlu0 %26
    %28 = vset.pattern.permute.xlu0 0
    %29 = vperm.xlu0 %28, %v20
    %v30 = vpop.permute.xlu0 %29
    %vm31 = vcmp.eq.s32.totalorder %v24, %v27
    %vm32 = vcmp.eq.s32.totalorder %v24, %v30
    %v33 = vsel %vm31, 1, 0
    %v34 = vsel %vm32, 1, 0
    %v35 = vcvt.s32.f32 %v33
    %v36 = vcvt.s32.f32 %v34
    %37 = vset.pattern.permute.xlu0 0
    %38 = vperm.xlu0 %37, %v21
    %v39 = vpop.permute.xlu0 %38
    %40 = vset.pattern.permute.xlu0 0
    %41 = vperm.xlu0 %40, %v22
    %v42 = vpop.permute.xlu0 %41
    %vm43 = vcmp.eq.s32.totalorder %v24, %v39
    %vm44 = vcmp.eq.s32.totalorder %v24, %v42
    %v45 = vsel %vm43, 1, 0
    %v46 = vsel %vm44, 1, 0
    %v47 = vcvt.s32.f32 %v45
    %v48 = vcvt.s32.f32 %v46
    %v49 = vsub.f32 %v35, %v47
    %v50 = vsub.f32 %v36, %v48
    %v51 = vpack.c.bf16 %v50, %v49
    %v52 = vld [vmem:[%s0] sm:$0xf]
    %v53 = vld [vmem:[%s0 + $0x4] sm:$0xf]
    %v54 = vld [vmem:[%s0 + $0x8] sm:$0xf]
    %v55 = vld [vmem:[%s0 + $0xc] sm:$0xf]
    %v60 = vunpack.c.l.b16 %v52
    %v61 = vunpack.c.l.b16 %v53
    %v62 = vunpack.c.l.b16 %v54
    %v63 = vunpack.c.l.b16 %v55
    %v64 = vpack.c.b16 %v61, %v60
    %v65 = vpack.c.b16 %v63, %v62
    %vm68 = vcmask 261120
    %v70 = vsel %vm68, %v51, 0
    %72 = vmatprep.subr.bf16.mxu0 0
    %73 = vmatpush1.bf16.msra.mxu0 0
    %74 = vmatprep.subr.bf16.mxu0 0
    %75 = vmatpush1.bf16.msra.mxu0 0
    %76 = vmatprep.subr.bf16.mxu0 0
    %77 = vmatpush1.bf16.msra.mxu0 0
    %78 = vmatprep.subr.bf16.mxu0 0
    %79 = vmatpush1.bf16.msra.mxu0 0
    %80 = vmatprep.subr.bf16.mxu0 0
    %81 = vmatpush1.bf16.msra.mxu0 0
    %82 = vmatprep.subr.bf16.mxu0 0
    %83 = vmatpush1.bf16.msra.mxu0 0
    %84 = vmatprep.subr.bf16.mxu0 0
    %85 = vmatpush1.bf16.msra.mxu0 %v65
    %86 = vmatprep.subr.bf16.mxu0 0
    %87 = vmatpush1.bf16.msra.mxu0 %v64
    %88 = vmatprep.subr.bf16.mxu0 0
    %89 = vmatpush2.bf16.msra.mxu0 0
    %90 = vmatprep.subr.bf16.mxu0 0
    %91 = vmatpush2.bf16.msra.mxu0 0
    %92 = vmatprep.subr.bf16.mxu0 0
    %93 = vmatpush2.bf16.msra.mxu0 0
    %94 = vmatprep.subr.bf16.mxu0 0
    %95 = vmatpush2.bf16.msra.mxu0 0
    %96 = vmatprep.subr.bf16.mxu0 0
    %97 = vmatpush2.bf16.msra.mxu0 0
    %98 = vmatprep.subr.bf16.mxu0 0
    %99 = vmatpush2.bf16.msra.mxu0 0
    %100 = vmatprep.subr.bf16.mxu0 0
    %101 = vmatpush2.bf16.msra.mxu0 0
    %102 = vmatprep.subr.bf16.mxu0 0
    %103 = vmatpush2.bf16.msra.mxu0 0
    %104 = vmatprep.mubr.bf16.mxu0 0
    %105 = vmatmul.mubr.bf16.gmra.mxu0 %v70
    %v106 = vpop.f32.mrf.mxu0
    %v107 = vadd.f32 0.0, %v106
    %v108 = vpop.f32.mrf.mxu0
    %v109 = vpop.f32.mrf.mxu0
    %v110 = vadd.f32 0.0, %v109
    %v111 = vpop.f32.mrf.mxu0
    %112 = vdwg.mxu0
    %115 = vrot.lane.b32.xlu0 %v107, 96
    %v116 = vpop.permute.xlu0 %115
    %117 = vrot.lane.b32.xlu0 %v110, 96
    %v118 = vpop.permute.xlu0 %117
    %v121 = vadd.f32 %v107, %v116
    %v122 = vadd.f32 %v110, %v118
    %v123 = vadd.f32 %v121, 1e-06
    %v124 = vadd.f32 %v122, 1e-06
    %v125 = vmul.f32 %v123, %v123
    %v126 = vmul.f32 %v124, %v124
    %v127 = vsel %vm68, %v125, 0.0
    %128 = vadd.xlane.f32.xlu0 %v127
    %v129 = vpop.xlane.xlu0 %128
    %v130 = vsel %vm68, %v126, 0.0
    %131 = vadd.xlane.f32.xlu0 %v130
    %v132 = vpop.xlane.xlu0 %131
    %v133 = vrsqrt.pop %v129
    %v134 = vmul.f32 %v129, %v133
    %vm135 = vcmp.eq.f32.partialorder %v129, inf
    %v136 = vsel %vm135, %v129, %v134
    %vm137 = vcmp.eq.f32.partialorder %v129, 0.0
    %v138 = vand.u32 %v129, 2147483648
    %v139 = vsel %vm137, %v138, %v136
    %v140 = vrsqrt.pop %v132
    %v141 = vmul.f32 %v132, %v140
    %vm142 = vcmp.eq.f32.partialorder %v132, inf
    %v143 = vsel %vm142, %v132, %v141
    %vm144 = vcmp.eq.f32.partialorder %v132, 0.0
    %v145 = vand.u32 %v132, 2147483648
    %v146 = vsel %vm144, %v145, %v143
    %v147 = vand.u32 2147483647, %v107
    %v148 = vand.u32 2147483647, %v110
    %vm149 = vcmp.eq.f32.partialorder %v147, 4.0
    %vm150 = vcmp.eq.f32.partialorder %v148, 4.0
    %v151 = vsel %vm149, 1, 0
    %v152 = vsel %vm150, 1, 0
    %v153 = vcvt.s32.f32 %v151
    %v154 = vcvt.s32.f32 %v152
    %v155 = vmul.f32 %v153, 15.0
    %v156 = vmul.f32 %v154, 15.0
    %vm157 = vcmp.eq.f32.partialorder %v147, 1.0
    %vm158 = vcmp.eq.f32.partialorder %v148, 1.0
    %v159 = vsel %vm157, 1, 0
    %v160 = vsel %vm158, 1, 0
    %v161 = vcvt.s32.f32 %v159
    %v162 = vcvt.s32.f32 %v160
    %v163 = vmul.f32 %v161, 2.0
    %v164 = vmul.f32 %v162, 2.0
    %v165 = vadd.f32 %v155, %v163
    %v166 = vadd.f32 %v156, %v164
    %vm167 = vcmp.eq.f32.partialorder %v147, 3.0
    %vm168 = vcmp.eq.f32.partialorder %v148, 3.0
    %v169 = vsel %vm167, 1, 0
    %v170 = vsel %vm168, 1, 0
    %v171 = vcvt.s32.f32 %v169
    %v172 = vcvt.s32.f32 %v170
    %v173 = vmul.f32 %v171, 17.0
    %v174 = vmul.f32 %v172, 17.0
    %v175 = vadd.f32 %v165, %v173
    %v176 = vadd.f32 %v166, %v174
    %v177 = vld [vmem:[%s3] sm:$0xff]
    %v178 = vld [vmem:[%s3 + $0x8] sm:$0xff]
    %v179 = vsub.f32 %v175, %v139
    %v180 = vsub.f32 %v176, %v146
    %v181 = vand.u32 2147483647, %v179
    %v182 = vand.u32 2147483647, %v180
    %185 = vrot.lane.b32.xlu0 %v181, 64
    %v186 = vpop.permute.xlu0 %185
    %187 = vrot.lane.b32.xlu0 %v182, 64
    %v188 = vpop.permute.xlu0 %187
    %v191 = vmul.f32 %v177, %v186
    %v192 = vmul.f32 %v178, %v188
    %vm193 = vcmask 7168
    %v194 = vsel %vm193, %v191, 0.0
    %v195 = vsel %vm193, %v192, 0.0
    %v196 = vadd.f32 %v194, %v195
    %197 = vadd.xlane.f32.xlu0 %v196
    %v198 = vpop.xlane.xlu0 %197
    %v199 = vrot.slane %v198, 4
    %v200 = vadd.f32 %v198, %v199
    %v201 = vrot.slane %v200, 2
    %v202 = vadd.f32 %v200, %v201
    %v203 = vrot.slane %v202, 1
    %v204 = vadd.f32 %v202, %v203
    %s205 = vtos %v204
    %v206 = vstv %s205
    %207 = vst [vmem:[#allocation2] sm:$0xff] %v206
    // Predicated region
    $region18: #{tpu_custom_call.1} parent=1 // pred_check
      _
    $region19: #{tpu_custom_call.1} parent=1 // pred_check_branch
      %209 = sbr.rel (0) target = $region21
    $region20: #{tpu_custom_call.1} parent=1 // pred_region
      %s211 = ssub.s32 128, 128
      %212 = vsyncadd [#allocation3], %s211
      %s214 = sshll.u32 [#allocation2], 4
      %s215 = int_to_ptr.vmem [resolvable:$true] %s214
      %217 = dma.vmem_to_hbm [thread:$0]  %s215, 128, %s4, [#allocation3]
    $region21: #{tpu_custom_call.1} parent=1 // pred_fallthru
      _
    // Predicated region
    $region22: #{tpu_custom_call.1} parent=1 // pred_check
      _
    $region23: #{tpu_custom_call.1} parent=1 // pred_check_branch
      %219 = sbr.rel (0) target = $region25
    $region24: #{tpu_custom_call.1} parent=1 // pred_region
      %220 = dma.done [#allocation3], 128
    $region25: #{tpu_custom_call.1} parent=1 // pred_fallthru
      _
    %221 = vsyncpa [#allocation3], 1

</llo_original>
